<compile_context>
chip_gen: v5e
topology: v5e:2x2
jax: 0.10.0
libtpu: 0.0.40
codegen_flags: <defaults>
</compile_context>

<pallas_src>
import jax
import jax.numpy as jnp
from jax.experimental import pallas as pl
from jax.experimental.pallas import tpu as pltpu


def _leaky_relu(x, slope=0.2):
    return jnp.where(x > 0, x, slope * x)


def _round_up(n, m):
    return ((n + m - 1) // m) * m


def mlp_kernel(x_ref, w1_ref, b1_ref, w2_ref, b2_ref, w3_ref, b3_ref,
               w4_ref, b4_ref, o_ref):
    cdt = w1_ref.dtype  # streaming/compute dtype (bfloat16)

    h = jnp.dot(x_ref[...], w1_ref[...],
                preferred_element_type=jnp.float32) + b1_ref[...]
    h = _leaky_relu(h)
    h = jnp.dot(h.astype(cdt), w2_ref[...],
                preferred_element_type=jnp.float32) + b2_ref[...]
    h = _leaky_relu(h)
    h = jnp.dot(h.astype(cdt), w3_ref[...],
                preferred_element_type=jnp.float32) + b3_ref[...]
    h = _leaky_relu(h)
    h = jnp.dot(h.astype(cdt), w4_ref[...],
                preferred_element_type=jnp.float32) + b4_ref[...]
    o_ref[...] = h.astype(o_ref.dtype)


def mlp_forward(x, params, *, tm=512, compute_dtype=jnp.bfloat16):
    """x: [N, nin] float32.  params: 4 tuples (weight[in, out], bias[1, out])."""
    (w1, b1), (w2, b2), (w3, b3), (w4, b4) = params
    N, nin = x.shape
    nh = w1.shape[1]
    nout = w4.shape[1]
    out_dtype = x.dtype

    # ---- lane-dense output: pad the final layer to a multiple of 128 output lanes ----
    nout_p = max(128, _round_up(nout, 128))
    if nout_p != nout:
        w4 = jnp.pad(w4, ((0, 0), (0, nout_p - nout)))
        b4 = jnp.pad(b4, ((0, 0), (0, nout_p - nout)))

    # ---- batch tiling: big tiles, pad N, keep >=2 grid steps when N allows (megacore) ----
    align = 16  # multiple of 8 sublanes; 16 keeps bf16 sublane packing happy
    tm_eff = min(tm, _round_up(N, align))
    if N > align and pl.cdiv(N, tm_eff) < 2:
        tm_eff = max(align, _round_up(pl.cdiv(N, 2), align))
    Np = _round_up(N, tm_eff)
    if Np != N:
        x = jnp.pad(x, ((0, Np - N), (0, 0)))  # padded rows are sliced off afterwards

    # ---- bf16 streaming inputs; biases stay f32 for the f32 epilogue ----
    x_c = x.astype(compute_dtype)
    w1c, w2c, w3c, w4c = (w.astype(compute_dtype) for w in (w1, w2, w3, w4))
    b1f, b2f, b3f, b4f = (b.astype(jnp.float32) for b in (b1, b2, b3, b4))

    grid = (Np // tm_eff,)

    def full2d(arr):
        # Whole-array resident block; constant index_map -> loaded once, no re-DMA.
        # TODO(synk): if nh is ever scaled up, add pipeline_mode=pl.Buffered(1) on these
        # to drop default double-buffering and halve their VMEM footprint on v7x.
        return pl.BlockSpec(arr.shape, lambda i: (0, 0))

    itemsize_c = x_c.dtype.itemsize
    weight_bytes = sum(int(a.size) * a.dtype.itemsize for a in (w1c, w2c, w3c, w4c))
    bias_bytes = sum(int(a.size) * a.dtype.itemsize for a in (b1f, b2f, b3f, b4f))

    # Advisory cost estimate so XLA schedules this custom call well inside the GCL graph.
    flops = 2 * Np * (nin * nh + 2 * nh * nh + nh * nout_p)
    bytes_accessed = (int(x_c.size) * itemsize_c
                      + Np * nout_p * 4
                      + weight_bytes + bias_bytes)
    cost = pl.CostEstimate(flops=flops, transcendentals=0,
                           bytes_accessed=bytes_accessed)

    # Explicit VMEM budget (double-buffered x/out tiles + resident params + live f32
    # intermediates), generous headroom, capped under v7x's 64 MiB physical VMEM.
    tile_bytes = (2 * tm_eff * nin * itemsize_c           # x tile, double-buffered
                  + 2 * tm_eff * nout_p * 4               # out tile, double-buffered
                  + 2 * weight_bytes + 2 * bias_bytes     # params (default 2x buffered)
                  + 6 * tm_eff * max(nh, nout_p) * 4)     # live f32 intermediates
    vmem_limit = int(min(64 * 1024 * 1024, max(16 * 1024 * 1024, 2 * tile_bytes)))

    out_p = pl.pallas_call(
        mlp_kernel,
        out_shape=jax.ShapeDtypeStruct((Np, nout_p), jnp.float32),
        grid_spec=pltpu.PrefetchScalarGridSpec(
            num_scalar_prefetch=0,
            grid=grid,
            in_specs=[
                pl.BlockSpec((tm_eff, nin), lambda i: (i, 0)),   # x tile over batch rows
                full2d(w1c), full2d(b1f),
                full2d(w2c), full2d(b2f),
                full2d(w3c), full2d(b3f),
                full2d(w4c), full2d(b4f),
            ],
            out_specs=pl.BlockSpec((tm_eff, nout_p), lambda i: (i, 0)),
        ),
        compiler_params=pltpu.CompilerParams(
            dimension_semantics=("parallel",),
            vmem_limit_bytes=vmem_limit),
        cost_estimate=cost,
    )(x_c, w1c, b1f, w2c, b2f, w3c, b3f, w4c, b4f)

    # Strip row padding and the lane padding of the last layer.
    return out_p[:N, :nout].astype(out_dtype)


def init_mlp_params(key, nin, nout, nh):
    """Deterministic init mirroring nn.Linear's default U(-1/sqrt(fan_in), 1/sqrt(fan_in))."""
    dims = [(nin, nh), (nh, nh), (nh, nh), (nh, nout)]
    params = []
    for (fan_in, fan_out) in dims:
        key, kw, kb = jax.random.split(key, 3)
        bound = 1.0 / jnp.sqrt(fan_in)
        w = jax.random.uniform(kw, (fan_in, fan_out), jnp.float32, -bound, bound)
        b = jax.random.uniform(kb, (1, fan_out), jnp.float32, -bound, bound)
        params.append((w, b))
    return params


def mlp_reference(x, params, compute_dtype=jnp.float32):
    """Pure-JAX reference; compute_dtype mirrors the kernel's streaming-input rounding."""
    h = x
    for i, (w, b) in enumerate(params):
        hm = h.astype(compute_dtype).astype(jnp.float32)
        wm = w.astype(compute_dtype).astype(jnp.float32)
        h = hm @ wm + b.astype(jnp.float32)
        if i < len(params) - 1:
            h = jnp.where(h > 0, h, 0.2 * h)
    return h


if __name__ == "__main__":
    key = jax.random.PRNGKey(0)
    N, nin, nh, nout = 200, 16, 32, 8   # ragged N exercises padding + 2-step grid

    kx, kp = jax.random.split(key)
    x = jax.random.normal(kx, (N, nin), jnp.float32)
    params = init_mlp_params(kp, nin, nout, nh)

    out = mlp_forward(x, params)
    out = jax.block_until_ready(out)
    assert out.shape == (N, nout)

    # Exact-path comparison (reference rounds streaming inputs to bf16 like the kernel).
    ref_bf16 = mlp_reference(x, params, compute_dtype=jnp.bfloat16)
    assert jnp.allclose(out, ref_bf16, atol=1e-3, rtol=1e-3), \
        float(jnp.max(jnp.abs(out - ref_bf16)))

    # Sanity check against the full-f32 reference (bf16 streaming error budget).
    ref_f32 = mlp_reference(x, params, compute_dtype=jnp.float32)
    assert jnp.allclose(out, ref_f32, atol=5e-2, rtol=5e-2), \
        float(jnp.max(jnp.abs(out - ref_f32)))

    print("KERNEL_OK")
</pallas_src>

<mosaic_0001>
module attributes {stable_mosaic.version = 11 : i64} {
  func.func @mlp_kernel(%arg0: i32, %arg1: memref<112x16xbf16, #tpu.memory_space<vmem>>, %arg2: memref<16x32xbf16, #tpu.memory_space<vmem>>, %arg3: memref<1x32xf32, #tpu.memory_space<vmem>>, %arg4: memref<32x32xbf16, #tpu.memory_space<vmem>>, %arg5: memref<1x32xf32, #tpu.memory_space<vmem>>, %arg6: memref<32x32xbf16, #tpu.memory_space<vmem>>, %arg7: memref<1x32xf32, #tpu.memory_space<vmem>>, %arg8: memref<32x128xbf16, #tpu.memory_space<vmem>>, %arg9: memref<1x128xf32, #tpu.memory_space<vmem>>, %arg10: memref<112x128xf32, #tpu.memory_space<vmem>>) attributes {dimension_semantics = [#tpu.dimension_semantics<parallel>], iteration_bounds = array<i64: 2>, scalar_prefetch = 0 : i64, scratch_operands = 0 : i64, tpu.core_type = #tpu.core_type<tc>, window_params = [{transform_indices = @transform_0, window_bounds = array<i64: 112, 16>}, {pipeline_mode = #tpu.pipeline_mode<synchronous>, transform_indices = @transform_1, window_bounds = array<i64: 16, 32>}, {pipeline_mode = #tpu.pipeline_mode<synchronous>, transform_indices = @transform_2, window_bounds = array<i64: 1, 32>}, {pipeline_mode = #tpu.pipeline_mode<synchronous>, transform_indices = @transform_3, window_bounds = array<i64: 32, 32>}, {pipeline_mode = #tpu.pipeline_mode<synchronous>, transform_indices = @transform_4, window_bounds = array<i64: 1, 32>}, {pipeline_mode = #tpu.pipeline_mode<synchronous>, transform_indices = @transform_5, window_bounds = array<i64: 32, 32>}, {pipeline_mode = #tpu.pipeline_mode<synchronous>, transform_indices = @transform_6, window_bounds = array<i64: 1, 32>}, {pipeline_mode = #tpu.pipeline_mode<synchronous>, transform_indices = @transform_7, window_bounds = array<i64: 32, 128>}, {pipeline_mode = #tpu.pipeline_mode<synchronous>, transform_indices = @transform_8, window_bounds = array<i64: 1, 128>}, {transform_indices = @transform_9, window_bounds = array<i64: 112, 128>}]} {
    %c0 = arith.constant 0 : index
    %c0_0 = arith.constant 0 : index
    %0 = vector.load %arg1[%c0, %c0_0] : memref<112x16xbf16, #tpu.memory_space<vmem>>, vector<112x16xbf16>
    %c0_1 = arith.constant 0 : index
    %c0_2 = arith.constant 0 : index
    %1 = vector.load %arg2[%c0_1, %c0_2] : memref<16x32xbf16, #tpu.memory_space<vmem>>, vector<16x32xbf16>
    %cst = arith.constant dense<0.000000e+00> : vector<112x32xf32>
    %2 = tpu.matmul %0, %1, %cst {dimension_numbers = #tpu.dot_dimension_numbers<[1], [0], [0], [1], [0, 0, 1, 1], [], []>} : vector<112x16xbf16>, vector<16x32xbf16>, vector<112x32xf32> -> vector<112x32xf32>
    %c0_3 = arith.constant 0 : index
    %c0_4 = arith.constant 0 : index
    %3 = vector.load %arg3[%c0_3, %c0_4] : memref<1x32xf32, #tpu.memory_space<vmem>>, vector<1x32xf32>
    %4 = vector.broadcast %3 : vector<1x32xf32> to vector<112x32xf32>
    %5 = arith.addf %2, %4 : vector<112x32xf32>
    %cst_5 = arith.constant 0.000000e+00 : f32
    %6 = vector.broadcast %cst_5 : f32 to vector<112x32xf32>
    %7 = arith.cmpf ogt, %5, %6 : vector<112x32xf32>
    %cst_6 = arith.constant 2.000000e-01 : f32
    %8 = vector.broadcast %cst_6 : f32 to vector<112x32xf32>
    %9 = arith.mulf %8, %5 : vector<112x32xf32>
    %10 = arith.select %7, %5, %9 : vector<112x32xi1>, vector<112x32xf32>
    %11 = arith.truncf %10 : vector<112x32xf32> to vector<112x32xbf16>
    %c0_7 = arith.constant 0 : index
    %c0_8 = arith.constant 0 : index
    %12 = vector.load %arg4[%c0_7, %c0_8] : memref<32x32xbf16, #tpu.memory_space<vmem>>, vector<32x32xbf16>
    %cst_9 = arith.constant dense<0.000000e+00> : vector<112x32xf32>
    %13 = tpu.matmul %11, %12, %cst_9 {dimension_numbers = #tpu.dot_dimension_numbers<[1], [0], [0], [1], [0, 0, 1, 1], [], []>} : vector<112x32xbf16>, vector<32x32xbf16>, vector<112x32xf32> -> vector<112x32xf32>
    %c0_10 = arith.constant 0 : index
    %c0_11 = arith.constant 0 : index
    %14 = vector.load %arg5[%c0_10, %c0_11] : memref<1x32xf32, #tpu.memory_space<vmem>>, vector<1x32xf32>
    %15 = vector.broadcast %14 : vector<1x32xf32> to vector<112x32xf32>
    %16 = arith.addf %13, %15 : vector<112x32xf32>
    %cst_12 = arith.constant 0.000000e+00 : f32
    %17 = vector.broadcast %cst_12 : f32 to vector<112x32xf32>
    %18 = arith.cmpf ogt, %16, %17 : vector<112x32xf32>
    %cst_13 = arith.constant 2.000000e-01 : f32
    %19 = vector.broadcast %cst_13 : f32 to vector<112x32xf32>
    %20 = arith.mulf %19, %16 : vector<112x32xf32>
    %21 = arith.select %18, %16, %20 : vector<112x32xi1>, vector<112x32xf32>
    %22 = arith.truncf %21 : vector<112x32xf32> to vector<112x32xbf16>
    %c0_14 = arith.constant 0 : index
    %c0_15 = arith.constant 0 : index
    %23 = vector.load %arg6[%c0_14, %c0_15] : memref<32x32xbf16, #tpu.memory_space<vmem>>, vector<32x32xbf16>
    %cst_16 = arith.constant dense<0.000000e+00> : vector<112x32xf32>
    %24 = tpu.matmul %22, %23, %cst_16 {dimension_numbers = #tpu.dot_dimension_numbers<[1], [0], [0], [1], [0, 0, 1, 1], [], []>} : vector<112x32xbf16>, vector<32x32xbf16>, vector<112x32xf32> -> vector<112x32xf32>
    %c0_17 = arith.constant 0 : index
    %c0_18 = arith.constant 0 : index
    %25 = vector.load %arg7[%c0_17, %c0_18] : memref<1x32xf32, #tpu.memory_space<vmem>>, vector<1x32xf32>
    %26 = vector.broadcast %25 : vector<1x32xf32> to vector<112x32xf32>
    %27 = arith.addf %24, %26 : vector<112x32xf32>
    %cst_19 = arith.constant 0.000000e+00 : f32
    %28 = vector.broadcast %cst_19 : f32 to vector<112x32xf32>
    %29 = arith.cmpf ogt, %27, %28 : vector<112x32xf32>
    %cst_20 = arith.constant 2.000000e-01 : f32
    %30 = vector.broadcast %cst_20 : f32 to vector<112x32xf32>
    %31 = arith.mulf %30, %27 : vector<112x32xf32>
    %32 = arith.select %29, %27, %31 : vector<112x32xi1>, vector<112x32xf32>
    %33 = arith.truncf %32 : vector<112x32xf32> to vector<112x32xbf16>
    %c0_21 = arith.constant 0 : index
    %c0_22 = arith.constant 0 : index
    %34 = vector.load %arg8[%c0_21, %c0_22] : memref<32x128xbf16, #tpu.memory_space<vmem>>, vector<32x128xbf16>
    %cst_23 = arith.constant dense<0.000000e+00> : vector<112x128xf32>
    %35 = tpu.matmul %33, %34, %cst_23 {dimension_numbers = #tpu.dot_dimension_numbers<[1], [0], [0], [1], [0, 0, 1, 1], [], []>} : vector<112x32xbf16>, vector<32x128xbf16>, vector<112x128xf32> -> vector<112x128xf32>
    %c0_24 = arith.constant 0 : index
    %c0_25 = arith.constant 0 : index
    %36 = vector.load %arg9[%c0_24, %c0_25] : memref<1x128xf32, #tpu.memory_space<vmem>>, vector<1x128xf32>
    %37 = vector.broadcast %36 : vector<1x128xf32> to vector<112x128xf32>
    %38 = arith.addf %35, %37 : vector<112x128xf32>
    %c0_26 = arith.constant 0 : index
    %c0_27 = arith.constant 0 : index
    %39 = vector.load %arg10[%c0_26, %c0_27] : memref<112x128xf32, #tpu.memory_space<vmem>>, vector<112x128xf32>
    tpu.vector_store %arg10[%c0_26, %c0_27], %38 {strides = array<i32>} : memref<112x128xf32, #tpu.memory_space<vmem>>, vector<112x128xf32>,
    return
  }
  func.func @transform_0(%arg0: i32) -> (i32, i32) {
    %c0_i32 = arith.constant 0 : i32
    %c0_i32_0 = arith.constant 0 : i32
    return %arg0, %c0_i32 : i32, i32
  }
  func.func @transform_1(%arg0: i32) -> (i32, i32) {
    %c0_i32 = arith.constant 0 : i32
    %c0_i32_0 = arith.constant 0 : i32
    %c0_i32_1 = arith.constant 0 : i32
    return %c0_i32, %c0_i32_0 : i32, i32
  }
  func.func @transform_2(%arg0: i32) -> (i32, i32) {
    %c0_i32 = arith.constant 0 : i32
    %c0_i32_0 = arith.constant 0 : i32
    %c0_i32_1 = arith.constant 0 : i32
    return %c0_i32, %c0_i32_0 : i32, i32
  }
  func.func @transform_3(%arg0: i32) -> (i32, i32) {
    %c0_i32 = arith.constant 0 : i32
    %c0_i32_0 = arith.constant 0 : i32
    %c0_i32_1 = arith.constant 0 : i32
    return %c0_i32, %c0_i32_0 : i32, i32
  }
  func.func @transform_4(%arg0: i32) -> (i32, i32) {
    %c0_i32 = arith.constant 0 : i32
    %c0_i32_0 = arith.constant 0 : i32
    %c0_i32_1 = arith.constant 0 : i32
    return %c0_i32, %c0_i32_0 : i32, i32
  }
  func.func @transform_5(%arg0: i32) -> (i32, i32) {
    %c0_i32 = arith.constant 0 : i32
    %c0_i32_0 = arith.constant 0 : i32
    %c0_i32_1 = arith.constant 0 : i32
    return %c0_i32, %c0_i32_0 : i32, i32
  }
  func.func @transform_6(%arg0: i32) -> (i32, i32) {
    %c0_i32 = arith.constant 0 : i32
    %c0_i32_0 = arith.constant 0 : i32
    %c0_i32_1 = arith.constant 0 : i32
    return %c0_i32, %c0_i32_0 : i32, i32
  }
  func.func @transform_7(%arg0: i32) -> (i32, i32) {
    %c0_i32 = arith.constant 0 : i32
    %c0_i32_0 = arith.constant 0 : i32
    %c0_i32_1 = arith.constant 0 : i32
    return %c0_i32, %c0_i32_0 : i32, i32
  }
  func.func @transform_8(%arg0: i32) -> (i32, i32) {
    %c0_i32 = arith.constant 0 : i32
    %c0_i32_0 = arith.constant 0 : i32
    %c0_i32_1 = arith.constant 0 : i32
    return %c0_i32, %c0_i32_0 : i32, i32
  }
  func.func @transform_9(%arg0: i32) -> (i32, i32) {
    %c0_i32 = arith.constant 0 : i32
    %c0_i32_0 = arith.constant 0 : i32
    return %arg0, %c0_i32 : i32, i32
  }
}

</mosaic_0001>

<llo_original>
// kernel: tpu_custom_call.1
$region0: #{tpu_custom_call.1}
  #allocation0 [shape = 'u32[]', space=smem, size = 0x4, offset = 0x4, fixed_abs, tag = 'smem constant byte address 0x4 - core index']
  #allocation1 [shape = 'u32[72,128]{1,0:T(1,128)}', space=vmem, size = 0x9000, scoped, tag = 'internal scratch']
  %s0 = inlined_call_operand.vmem [shape: bf16[224,16], index: 0, kind: input, shape index: {}]
  %s1 = inlined_call_operand.vmem [shape: bf16[16,32], index: 1, kind: input, shape index: {}]
  %s2 = inlined_call_operand.vmem [shape: f32[1,32], index: 2, kind: input, shape index: {}]
  %s3 = inlined_call_operand.vmem [shape: bf16[32,32], index: 3, kind: input, shape index: {}]
  %s4 = inlined_call_operand.vmem [shape: f32[1,32], index: 4, kind: input, shape index: {}]
  %s5 = inlined_call_operand.vmem [shape: bf16[32,32], index: 5, kind: input, shape index: {}]
  %s6 = inlined_call_operand.vmem [shape: f32[1,32], index: 6, kind: input, shape index: {}]
  %s7 = inlined_call_operand.vmem [shape: bf16[32,128], index: 7, kind: input, shape index: {}]
  %s8 = inlined_call_operand.vmem [shape: f32[1,128], index: 8, kind: input, shape index: {}]
  %s9 = inlined_call_operand.hbm [shape: f32[224,128], index: 9, kind: output, shape index: {}]
  %s10 = sld [smem:[#allocation0]]
  $region69: #{tpu_custom_call.1} parent=0
    _
  %s12 = ssub.s32 1, %s10
  %s13 = scalar_select 0, %s12, %s10
  $region1: #{tpu_custom_call.1} parent=0
    #allocation2 [shape = 'u8[114688]{0}', space=vmem, size = 0x1c000, scoped, tag = 'output window, operand 0']
    #allocation3 [shape = 's32[2]{0}', space=sflag, size = 0x8, scoped, tag = 'scoped memory for tpu_custom_call.1']
    %14 = vsyncpa [#allocation3], 0
    %s15 = scalar_lea.sflag [#allocation3], 1
    %16 = vsyncpa %s15, 0
    loop: start=0, step=1, limit=4
    $region2: #{tpu_custom_call.1} parent=1 // loop_pre_header
      _
    $region3: #{tpu_custom_call.1} parent=1 // loop_header
      %s18 = sphi 0, %s22
      %p19 = scmp.ge.s32.totalorder %s18, 4
      %s28 = sphi 0, %s30
      %s31 = sphi 0, %s28
      %s32 = sphi 0, %s31
      %s48 = sphi 0, %s32
      %s52 = sphi 0, %s52
      %s54 = sphi 0, %s52
      %s55 = sphi 0, %s54
      %s69 = sphi 0, %s55
      %s73 = sphi 0, %s73
      %s75 = sphi 0, %s73
      %s76 = sphi 0, %s75
      %s90 = sphi 0, %s76
      %s94 = sphi 0, %s94
      %s96 = sphi 0, %s94
      %s97 = sphi 0, %s96
      %s111 = sphi 0, %s97
      %s115 = sphi 0, %s115
      %s117 = sphi 0, %s115
      %s118 = sphi 0, %s117
      %s132 = sphi 0, %s118
      %s136 = sphi 0, %s136
      %s138 = sphi 0, %s136
      %s139 = sphi 0, %s138
      %s153 = sphi 0, %s139
      %s157 = sphi 0, %s157
      %s159 = sphi 0, %s157
      %s160 = sphi 0, %s159
      %s174 = sphi 0, %s160
      %s178 = sphi 0, %s178
      %s180 = sphi 0, %s178
      %s181 = sphi 0, %s180
      %s195 = sphi 0, %s181
      %s199 = sphi 0, %s199
      %s201 = sphi 0, %s199
      %s202 = sphi 0, %s201
      %s216 = sphi 0, %s202
      %s222 = sphi 0, %s224
      %s225 = sphi 0, %s222
      %s226 = sphi 0, %s225
      %s242 = sphi 0, %s226
    $region4: #{tpu_custom_call.1} parent=1 // loop_header_branch
      %21 = sbr.rel (%p19) target = $region8
    $region5: #{tpu_custom_call.1} parent=1 // loop_body
      %s23 = ssub.s32 %s18, 1
      %s24 = ssub.s32 %s18, 2
      %s25 = sadd.s32 %s18, 1
      %s26 = ssub.s32 %s18, %s25
      %p27 = scmp.eq.s32.totalorder %s26, 0
      %s29 = sadd.s32 %s28, 1
      %s30 = scalar_select %p27, %s28, %s29
      %p33 = pneg %p27
      %p34 = scmp.eq.s32.totalorder %s18, 1
      %p35 = por %p33, %p34
      %p36 = scmp.ne.s32.totalorder %s28, %s31
      %p37 = scmp.eq.s32.totalorder %s18, 0
      %p38 = por %p36, %p37
      %p39 = scmp.ne.s32.totalorder %s28, %s31
      %p40 = scmp.eq.s32.totalorder %s23, 1
      %p41 = por %p39, %p40
      %p42 = scmp.ne.s32.totalorder %s31, %s32
      %p43 = scmp.eq.s32.totalorder %s23, 0
      %p44 = por %p42, %p43
      %p45 = scmp.ne.s32.totalorder %s31, %s32
      %p46 = scmp.eq.s32.totalorder %s24, 1
      %p47 = por %p45, %p46
      %p49 = scmp.ne.s32.totalorder %s32, %s48
      %p50 = scmp.eq.s32.totalorder %s24, 0
      %p51 = por %p49, %p50
      %s53 = sadd.s32 %s52, 1
      %p56 = scmp.eq.s32.totalorder %s18, 1
      %p57 = scmp.ne.s32.totalorder %s52, %s54
      %p58 = scmp.eq.s32.totalorder %s18, 0
      %p59 = por %p57, %p58
      %p60 = scmp.ne.s32.totalorder %s52, %s54
      %p61 = scmp.eq.s32.totalorder %s23, 1
      %p62 = por %p60, %p61
      %p63 = scmp.ne.s32.totalorder %s54, %s55
      %p64 = scmp.eq.s32.totalorder %s23, 0
      %p65 = por %p63, %p64
      %p66 = scmp.ne.s32.totalorder %s54, %s55
      %p67 = scmp.eq.s32.totalorder %s24, 1
      %p68 = por %p66, %p67
      %p70 = scmp.ne.s32.totalorder %s55, %s69
      %p71 = scmp.eq.s32.totalorder %s24, 0
      %p72 = por %p70, %p71
      %s74 = sadd.s32 %s73, 1
      %p77 = scmp.eq.s32.totalorder %s18, 1
      %p78 = scmp.ne.s32.totalorder %s73, %s75
      %p79 = scmp.eq.s32.totalorder %s18, 0
      %p80 = por %p78, %p79
      %p81 = scmp.ne.s32.totalorder %s73, %s75
      %p82 = scmp.eq.s32.totalorder %s23, 1
      %p83 = por %p81, %p82
      %p84 = scmp.ne.s32.totalorder %s75, %s76
      %p85 = scmp.eq.s32.totalorder %s23, 0
      %p86 = por %p84, %p85
      %p87 = scmp.ne.s32.totalorder %s75, %s76
      %p88 = scmp.eq.s32.totalorder %s24, 1
      %p89 = por %p87, %p88
      %p91 = scmp.ne.s32.totalorder %s76, %s90
      %p92 = scmp.eq.s32.totalorder %s24, 0
      %p93 = por %p91, %p92
      %s95 = sadd.s32 %s94, 1
      %p98 = scmp.eq.s32.totalorder %s18, 1
      %p99 = scmp.ne.s32.totalorder %s94, %s96
      %p100 = scmp.eq.s32.totalorder %s18, 0
      %p101 = por %p99, %p100
      %p102 = scmp.ne.s32.totalorder %s94, %s96
      %p103 = scmp.eq.s32.totalorder %s23, 1
      %p104 = por %p102, %p103
      %p105 = scmp.ne.s32.totalorder %s96, %s97
      %p106 = scmp.eq.s32.totalorder %s23, 0
      %p107 = por %p105, %p106
      %p108 = scmp.ne.s32.totalorder %s96, %s97
      %p109 = scmp.eq.s32.totalorder %s24, 1
      %p110 = por %p108, %p109
      %p112 = scmp.ne.s32.totalorder %s97, %s111
      %p113 = scmp.eq.s32.totalorder %s24, 0
      %p114 = por %p112, %p113
      %s116 = sadd.s32 %s115, 1
      %p119 = scmp.eq.s32.totalorder %s18, 1
      %p120 = scmp.ne.s32.totalorder %s115, %s117
      %p121 = scmp.eq.s32.totalorder %s18, 0
      %p122 = por %p120, %p121
      %p123 = scmp.ne.s32.totalorder %s115, %s117
      %p124 = scmp.eq.s32.totalorder %s23, 1
      %p125 = por %p123, %p124
      %p126 = scmp.ne.s32.totalorder %s117, %s118
      %p127 = scmp.eq.s32.totalorder %s23, 0
      %p128 = por %p126, %p127
      %p129 = scmp.ne.s32.totalorder %s117, %s118
      %p130 = scmp.eq.s32.totalorder %s24, 1
      %p131 = por %p129, %p130
      %p133 = scmp.ne.s32.totalorder %s118, %s132
      %p134 = scmp.eq.s32.totalorder %s24, 0
      %p135 = por %p133, %p134
      %s137 = sadd.s32 %s136, 1
      %p140 = scmp.eq.s32.totalorder %s18, 1
      %p141 = scmp.ne.s32.totalorder %s136, %s138
      %p142 = scmp.eq.s32.totalorder %s18, 0
      %p143 = por %p141, %p142
      %p144 = scmp.ne.s32.totalorder %s136, %s138
      %p145 = scmp.eq.s32.totalorder %s23, 1
      %p146 = por %p144, %p145
      %p147 = scmp.ne.s32.totalorder %s138, %s139
      %p148 = scmp.eq.s32.totalorder %s23, 0
      %p149 = por %p147, %p148
      %p150 = scmp.ne.s32.totalorder %s138, %s139
      %p151 = scmp.eq.s32.totalorder %s24, 1
      %p152 = por %p150, %p151
      %p154 = scmp.ne.s32.totalorder %s139, %s153
      %p155 = scmp.eq.s32.totalorder %s24, 0
      %p156 = por %p154, %p155
      %s158 = sadd.s32 %s157, 1
      %p161 = scmp.eq.s32.totalorder %s18, 1
      %p162 = scmp.ne.s32.totalorder %s157, %s159
      %p163 = scmp.eq.s32.totalorder %s18, 0
      %p164 = por %p162, %p163
      %p165 = scmp.ne.s32.totalorder %s157, %s159
      %p166 = scmp.eq.s32.totalorder %s23, 1
      %p167 = por %p165, %p166
      %p168 = scmp.ne.s32.totalorder %s159, %s160
      %p169 = scmp.eq.s32.totalorder %s23, 0
      %p170 = por %p168, %p169
      %p171 = scmp.ne.s32.totalorder %s159, %s160
      %p172 = scmp.eq.s32.totalorder %s24, 1
      %p173 = por %p171, %p172
      %p175 = scmp.ne.s32.totalorder %s160, %s174
      %p176 = scmp.eq.s32.totalorder %s24, 0
      %p177 = por %p175, %p176
      %s179 = sadd.s32 %s178, 1
      %p182 = scmp.eq.s32.totalorder %s18, 1
      %p183 = scmp.ne.s32.totalorder %s178, %s180
      %p184 = scmp.eq.s32.totalorder %s18, 0
      %p185 = por %p183, %p184
      %p186 = scmp.ne.s32.totalorder %s178, %s180
      %p187 = scmp.eq.s32.totalorder %s23, 1
      %p188 = por %p186, %p187
      %p189 = scmp.ne.s32.totalorder %s180, %s181
      %p190 = scmp.eq.s32.totalorder %s23, 0
      %p191 = por %p189, %p190
      %p192 = scmp.ne.s32.totalorder %s180, %s181
      %p193 = scmp.eq.s32.totalorder %s24, 1
      %p194 = por %p192, %p193
      %p196 = scmp.ne.s32.totalorder %s181, %s195
      %p197 = scmp.eq.s32.totalorder %s24, 0
      %p198 = por %p196, %p197
      %s200 = sadd.s32 %s199, 1
      %p203 = scmp.eq.s32.totalorder %s18, 1
      %p204 = scmp.ne.s32.totalorder %s199, %s201
      %p205 = scmp.eq.s32.totalorder %s18, 0
      %p206 = por %p204, %p205
      %p207 = scmp.ne.s32.totalorder %s199, %s201
      %p208 = scmp.eq.s32.totalorder %s23, 1
      %p209 = por %p207, %p208
      %p210 = scmp.ne.s32.totalorder %s201, %s202
      %p211 = scmp.eq.s32.totalorder %s23, 0
      %p212 = por %p210, %p211
      %p213 = scmp.ne.s32.totalorder %s201, %s202
      %p214 = scmp.eq.s32.totalorder %s24, 1
      %p215 = por %p213, %p214
      %p217 = scmp.ne.s32.totalorder %s202, %s216
      %p218 = scmp.eq.s32.totalorder %s24, 0
      %p219 = por %p217, %p218
      %s220 = ssub.s32 %s18, %s25
      %p221 = scmp.eq.s32.totalorder %s220, 0
      %s223 = sadd.s32 %s222, 1
      %s224 = scalar_select %p221, %s222, %s223
      %p227 = pneg %p221
      %p228 = scmp.eq.s32.totalorder %s18, 1
      %p229 = por %p227, %p228
      %p230 = scmp.ne.s32.totalorder %s222, %s225
      %p231 = scmp.eq.s32.totalorder %s18, 0
      %p232 = por %p230, %p231
      %p233 = scmp.ne.s32.totalorder %s222, %s225
      %p234 = scmp.eq.s32.totalorder %s23, 1
      %p235 = por %p233, %p234
      %p236 = scmp.ne.s32.totalorder %s225, %s226
      %p237 = scmp.eq.s32.totalorder %s23, 0
      %p238 = por %p236, %p237
      %p239 = scmp.ne.s32.totalorder %s225, %s226
      %p240 = scmp.eq.s32.totalorder %s24, 1
      %p241 = por %p239, %p240
      %p243 = scmp.ne.s32.totalorder %s226, %s242
      %p244 = scmp.eq.s32.totalorder %s24, 0
      %p245 = por %p243, %p244
      %p246 = scmp.le.s32.totalorder 1, %s18
      %p247 = scmp.lt.s32.totalorder %s18, 3
      %p248 = pnand %p246, %p247
      %p249 = pneg %p248
      // Predicated region
      $region9: #{tpu_custom_call.1} parent=5 // pred_check
        _
      $region10: #{tpu_custom_call.1} parent=5 // pred_check_branch
        %251 = sbr.rel (%p248) target = $region12
      $region11: #{tpu_custom_call.1} parent=5 // pred_region
        %s252 = ssub.s32 %s18, 1
        // Predicated region
        $region13: #{tpu_custom_call.1} parent=11 // pred_check
          %p253 = pneg %p65
        $region14: #{tpu_custom_call.1} parent=11 // pred_check_branch
          %255 = sbr.rel (%p253) target = $region16
        $region15: #{tpu_custom_call.1} parent=11 // pred_region
          _
        $region16: #{tpu_custom_call.1} parent=11 // pred_fallthru
          _
        // Predicated region
        $region17: #{tpu_custom_call.1} parent=11 // pred_check
          %p256 = pneg %p86
        $region18: #{tpu_custom_call.1} parent=11 // pred_check_branch
          %258 = sbr.rel (%p256) target = $region20
        $region19: #{tpu_custom_call.1} parent=11 // pred_region
          _
        $region20: #{tpu_custom_call.1} parent=11 // pred_fallthru
          _
        // Predicated region
        $region21: #{tpu_custom_call.1} parent=11 // pred_check
          %p259 = pneg %p107
        $region22: #{tpu_custom_call.1} parent=11 // pred_check_branch
          %261 = sbr.rel (%p259) target = $region24
        $region23: #{tpu_custom_call.1} parent=11 // pred_region
          _
        $region24: #{tpu_custom_call.1} parent=11 // pred_fallthru
          _
        // Predicated region
        $region25: #{tpu_custom_call.1} parent=11 // pred_check
          %p262 = pneg %p128
        $region26: #{tpu_custom_call.1} parent=11 // pred_check_branch
          %264 = sbr.rel (%p262) target = $region28
        $region27: #{tpu_custom_call.1} parent=11 // pred_region
          _
        $region28: #{tpu_custom_call.1} parent=11 // pred_fallthru
          _
        // Predicated region
        $region29: #{tpu_custom_call.1} parent=11 // pred_check
          %p265 = pneg %p149
        $region30: #{tpu_custom_call.1} parent=11 // pred_check_branch
          %267 = sbr.rel (%p265) target = $region32
        $region31: #{tpu_custom_call.1} parent=11 // pred_region
          _
        $region32: #{tpu_custom_call.1} parent=11 // pred_fallthru
          _
        // Predicated region
        $region33: #{tpu_custom_call.1} parent=11 // pred_check
          %p268 = pneg %p170
        $region34: #{tpu_custom_call.1} parent=11 // pred_check_branch
          %270 = sbr.rel (%p268) target = $region36
        $region35: #{tpu_custom_call.1} parent=11 // pred_region
          _
        $region36: #{tpu_custom_call.1} parent=11 // pred_fallthru
          _
        // Predicated region
        $region37: #{tpu_custom_call.1} parent=11 // pred_check
          %p271 = pneg %p191
        $region38: #{tpu_custom_call.1} parent=11 // pred_check_branch
          %273 = sbr.rel (%p271) target = $region40
        $region39: #{tpu_custom_call.1} parent=11 // pred_region
          _
        $region40: #{tpu_custom_call.1} parent=11 // pred_fallthru
          _
        // Predicated region
        $region41: #{tpu_custom_call.1} parent=11 // pred_check
          %p274 = pneg %p212
        $region42: #{tpu_custom_call.1} parent=11 // pred_check_branch
          %276 = sbr.rel (%p274) target = $region44
        $region43: #{tpu_custom_call.1} parent=11 // pred_region
          _
        $region44: #{tpu_custom_call.1} parent=11 // pred_fallthru
          _
      $region12: #{tpu_custom_call.1} parent=5 // pred_fallthru
        _
      %p277 = scmp.lt.s32.totalorder %s18, 2
      // Predicated region
      $region45: #{tpu_custom_call.1} parent=5 // pred_check
        %p278 = pneg %p277
      $region46: #{tpu_custom_call.1} parent=5 // pred_check_branch
        %280 = sbr.rel (%p278) target = $region48
      $region47: #{tpu_custom_call.1} parent=5 // pred_region
        // Predicated region
        $region49: #{tpu_custom_call.1} parent=47 // pred_check
          %p281 = pneg %p38
        $region50: #{tpu_custom_call.1} parent=47 // pred_check_branch
          %283 = sbr.rel (%p281) target = $region52
        $region51: #{tpu_custom_call.1} parent=47 // pred_region
          %s284 = smul.u32 14, %s18
          %p285 = scmp.lt.s32.totalorder %s284, 27
          %s286 = scalar_select %p285, %s284, 27
          %s287 = smul.addr %s286, 4
          %s288 = scalar_lea.vmem %s0, %s287
          %s289 = smul.u32 14, %s18
        $region52: #{tpu_custom_call.1} parent=47 // pred_fallthru
          _
      $region48: #{tpu_custom_call.1} parent=5 // pred_fallthru
        _
      %p290 = scmp.le.s32.totalorder 1, %s18
      %p291 = scmp.lt.s32.totalorder %s18, 3
      %p292 = pnand %p290, %p291
      %p293 = pneg %p292
      // Predicated region
      $region53: #{tpu_custom_call.1} parent=5 // pred_check
        _
      $region54: #{tpu_custom_call.1} parent=5 // pred_check_branch
        %295 = sbr.rel (%p292) target = $region56
      $region55: #{tpu_custom_call.1} parent=5 // pred_region
        %s296 = ssub.s32 %s18, 1
        %s297 = smul.u32 14, %s23
        %p298 = scmp.lt.s32.totalorder %s297, 27
        %s299 = scalar_select %p298, %s297, 27
        %s300 = smul.addr %s299, 4
        %s301 = scalar_lea.vmem %s0, %s300
        %p302 = pneg %p44
        %p303 = pneg %p41
        %p304 = pneg %p65
        %p305 = pneg %p62
        %p306 = pneg %p86
        %p307 = pneg %p83
        %p308 = pneg %p107
        %p309 = pneg %p104
        %p310 = pneg %p128
        %p311 = pneg %p125
        %p312 = pneg %p149
        %p313 = pneg %p146
        %p314 = pneg %p170
        %p315 = pneg %p167
        %p316 = pneg %p191
        %p317 = pneg %p188
        %p318 = pneg %p212
        %p319 = pneg %p209
        %p320 = pneg %p238
        %p321 = pneg %p235
        %s322 = sand.u32 %s225, 1
        %s323 = scalar_lea.sflag [#allocation3], %s322
        %s324 = sand.u32 %s225, 1
        %s325 = smul.addr %s324, 112
        %s326 = scalar_lea.vmem [#allocation2], %s325
        %s327 = smul.u32 14, %s23
        %p328 = scmp.lt.s32.totalorder %s327, 27
        %s329 = scalar_select %p328, %s327, 27
        %s330 = smul.addr %s329, 4
        %s331 = scalar_lea.vmem %s0, %s330
        %s332 = smul.u32 14, %s23
        %s333 = smul.u32 14, %s23
        %v335 = vld [vmem:[%s331] sm:$0xf]
        %v336 = vld [vmem:[%s331 + $0x4] sm:$0xf]
        %v337 = vld [vmem:[%s331 + $0x8] sm:$0xf]
        %v338 = vld [vmem:[%s331 + $0xc] sm:$0xf]
        %v339 = vld [vmem:[%s331 + $0x10] sm:$0xf]
        %v340 = vld [vmem:[%s331 + $0x14] sm:$0xf]
        %v341 = vld [vmem:[%s331 + $0x18] sm:$0xf]
        %v342 = vld [vmem:[%s331 + $0x1c] sm:$0xf]
        %v343 = vld [vmem:[%s331 + $0x20] sm:$0xf]
        %v344 = vld [vmem:[%s331 + $0x24] sm:$0xf]
        %v345 = vld [vmem:[%s331 + $0x28] sm:$0xf]
        %v346 = vld [vmem:[%s331 + $0x2c] sm:$0xf]
        %v347 = vld [vmem:[%s331 + $0x30] sm:$0xf]
        %v348 = vld [vmem:[%s331 + $0x34] sm:$0xf]
        %v349 = vld [vmem:[%s1] sm:$0xf]
        %v350 = vld [vmem:[%s1 + $0x4] sm:$0xf]
        %v351 = vld [vmem:[%s2] sm:$0x1]
        %v353 = vperm.slane %v351, 0
        %v369 = vunpack.c.l.b16 %v335
        %v370 = vunpack.c.l.b16 %v336
        %v371 = vunpack.c.l.b16 %v337
        %v372 = vunpack.c.l.b16 %v338
        %v373 = vunpack.c.l.b16 %v339
        %v374 = vunpack.c.l.b16 %v340
        %v375 = vunpack.c.l.b16 %v341
        %v376 = vunpack.c.l.b16 %v342
        %v377 = vunpack.c.l.b16 %v343
        %v378 = vunpack.c.l.b16 %v344
        %v379 = vunpack.c.l.b16 %v345
        %v380 = vunpack.c.l.b16 %v346
        %v381 = vunpack.c.l.b16 %v347
        %v382 = vunpack.c.l.b16 %v348
        %v383 = vpack.c.b16 %v370, %v369
        %v384 = vpack.c.b16 %v372, %v371
        %v385 = vpack.c.b16 %v374, %v373
        %v386 = vpack.c.b16 %v376, %v375
        %v387 = vpack.c.b16 %v378, %v377
        %v388 = vpack.c.b16 %v380, %v379
        %v389 = vpack.c.b16 %v382, %v381
        %v392 = vunpack.c.l.b16 %v349
        %v393 = vunpack.c.l.b16 %v350
        %v394 = vpack.c.b16 %v393, %v392
        %vm396 = vcmask 130048
        %v398 = vsel %vm396, %v383, 0
        %v401 = vsel %vm396, %v384, 0
        %v404 = vsel %vm396, %v385, 0
        %v407 = vsel %vm396, %v386, 0
        %v410 = vsel %vm396, %v387, 0
        %v413 = vsel %vm396, %v388, 0
        %v416 = vsel %vm396, %v389, 0
        %418 = vmatpush.bf16.msra.mxu0 0
        %419 = vmatpush.bf16.msra.mxu0 0
        %420 = vmatpush.bf16.msra.mxu0 0
        %421 = vmatpush.bf16.msra.mxu0 0
        %422 = vmatpush.bf16.msra.mxu0 0
        %423 = vmatpush.bf16.msra.mxu0 0
        %424 = vmatpush.bf16.msra.mxu0 0
        %425 = vmatpush.bf16.msra.mxu0 %v394
        %426 = vmatmul.bf16.gmra.mxu0 %v398
        %v427 = vpop.f32.mrf.mxu0
        %v428 = vadd.f32 %v353, %v427
        %v429 = vpop.f32.mrf.mxu0
        %v430 = vadd.f32 %v353, %v429
        %431 = vmatmul.bf16.gmra.mxu0 %v401
        %v432 = vpop.f32.mrf.mxu0
        %v433 = vadd.f32 %v353, %v432
        %v434 = vpop.f32.mrf.mxu0
        %v435 = vadd.f32 %v353, %v434
        %436 = vmatmul.bf16.gmra.mxu0 %v404
        %v437 = vpop.f32.mrf.mxu0
        %v438 = vadd.f32 %v353, %v437
        %v439 = vpop.f32.mrf.mxu0
        %v440 = vadd.f32 %v353, %v439
        %441 = vmatmul.bf16.gmra.mxu0 %v407
        %v442 = vpop.f32.mrf.mxu0
        %v443 = vadd.f32 %v353, %v442
        %v444 = vpop.f32.mrf.mxu0
        %v445 = vadd.f32 %v353, %v444
        %446 = vmatmul.bf16.gmra.mxu0 %v410
        %v447 = vpop.f32.mrf.mxu0
        %v448 = vadd.f32 %v353, %v447
        %v449 = vpop.f32.mrf.mxu0
        %v450 = vadd.f32 %v353, %v449
        %451 = vmatmul.bf16.gmra.mxu0 %v413
        %v452 = vpop.f32.mrf.mxu0
        %v453 = vadd.f32 %v353, %v452
        %v454 = vpop.f32.mrf.mxu0
        %v455 = vadd.f32 %v353, %v454
        %456 = vmatmul.bf16.gmra.mxu0 %v416
        %v457 = vpop.f32.mrf.mxu0
        %v458 = vadd.f32 %v353, %v457
        %v459 = vpop.f32.mrf.mxu0
        %v460 = vadd.f32 %v353, %v459
        %461 = vdwg.mxu0
        %vm462 = vcmp.gt.f32.partialorder %v428, 0.0
        %vm463 = vcmp.gt.f32.partialorder %v430, 0.0
        %vm464 = vcmp.gt.f32.partialorder %v433, 0.0
        %vm465 = vcmp.gt.f32.partialorder %v435, 0.0
        %vm466 = vcmp.gt.f32.partialorder %v438, 0.0
        %vm467 = vcmp.gt.f32.partialorder %v440, 0.0
        %vm468 = vcmp.gt.f32.partialorder %v443, 0.0
        %vm469 = vcmp.gt.f32.partialorder %v445, 0.0
        %vm470 = vcmp.gt.f32.partialorder %v448, 0.0
        %vm471 = vcmp.gt.f32.partialorder %v450, 0.0
        %vm472 = vcmp.gt.f32.partialorder %v453, 0.0
        %vm473 = vcmp.gt.f32.partialorder %v455, 0.0
        %vm474 = vcmp.gt.f32.partialorder %v458, 0.0
        %vm475 = vcmp.gt.f32.partialorder %v460, 0.0
        %v476 = vmul.f32 %v428, 0.2
        %v477 = vmul.f32 %v430, 0.2
        %v478 = vmul.f32 %v433, 0.2
        %v479 = vmul.f32 %v435, 0.2
        %v480 = vmul.f32 %v438, 0.2
        %v481 = vmul.f32 %v440, 0.2
        %v482 = vmul.f32 %v443, 0.2
        %v483 = vmul.f32 %v445, 0.2
        %v484 = vmul.f32 %v448, 0.2
        %v485 = vmul.f32 %v450, 0.2
        %v486 = vmul.f32 %v453, 0.2
        %v487 = vmul.f32 %v455, 0.2
        %v488 = vmul.f32 %v458, 0.2
        %v489 = vmul.f32 %v460, 0.2
        %v490 = vsel %vm462, %v428, %v476
        %v491 = vsel %vm463, %v430, %v477
        %v492 = vsel %vm464, %v433, %v478
        %v493 = vsel %vm465, %v435, %v479
        %v494 = vsel %vm466, %v438, %v480
        %v495 = vsel %vm467, %v440, %v481
        %v496 = vsel %vm468, %v443, %v482
        %v497 = vsel %vm469, %v445, %v483
        %v498 = vsel %vm470, %v448, %v484
        %v499 = vsel %vm471, %v450, %v485
        %v500 = vsel %vm472, %v453, %v486
        %v501 = vsel %vm473, %v455, %v487
        %v502 = vsel %vm474, %v458, %v488
        %v503 = vsel %vm475, %v460, %v489
        %v504 = vpack.c.bf16 %v491, %v490
        %v505 = vpack.c.bf16 %v493, %v492
        %v506 = vpack.c.bf16 %v495, %v494
        %v507 = vpack.c.bf16 %v497, %v496
        %v508 = vpack.c.bf16 %v499, %v498
        %v509 = vpack.c.bf16 %v501, %v500
        %v510 = vpack.c.bf16 %v503, %v502
        %v511 = vld [vmem:[%s3] sm:$0xf]
        %v512 = vld [vmem:[%s3 + $0x4] sm:$0xf]
        %v513 = vld [vmem:[%s3 + $0x8] sm:$0xf]
        %v514 = vld [vmem:[%s3 + $0xc] sm:$0xf]
        %v515 = vld [vmem:[%s4] sm:$0x1]
        %v517 = vperm.slane %v515, 0
        %v523 = vunpack.c.l.b16 %v511
        %v524 = vunpack.c.l.b16 %v512
        %v525 = vunpack.c.l.b16 %v513
        %v526 = vunpack.c.l.b16 %v514
        %v527 = vpack.c.b16 %v524, %v523
        %v528 = vpack.c.b16 %v526, %v525
        %vm531 = vcmask 261120
        %v533 = vsel %vm531, %v504, 0
        %v536 = vsel %vm531, %v505, 0
        %v539 = vsel %vm531, %v506, 0
        %v542 = vsel %vm531, %v507, 0
        %v545 = vsel %vm531, %v508, 0
        %v548 = vsel %vm531, %v509, 0
        %v551 = vsel %vm531, %v510, 0
        %553 = vmatpush.bf16.msra.mxu0 0
        %554 = vmatpush.bf16.msra.mxu0 0
        %555 = vmatpush.bf16.msra.mxu0 0
        %556 = vmatpush.bf16.msra.mxu0 0
        %557 = vmatpush.bf16.msra.mxu0 0
        %558 = vmatpush.bf16.msra.mxu0 0
        %559 = vmatpush.bf16.msra.mxu0 %v528
        %560 = vmatpush.bf16.msra.mxu0 %v527
        %561 = vmatmul.bf16.gmra.mxu0 %v533
        %v562 = vpop.f32.mrf.mxu0
        %v563 = vadd.f32 %v517, %v562
        %v564 = vpop.f32.mrf.mxu0
        %v565 = vadd.f32 %v517, %v564
        %566 = vmatmul.bf16.gmra.mxu0 %v536
        %v567 = vpop.f32.mrf.mxu0
        %v568 = vadd.f32 %v517, %v567
        %v569 = vpop.f32.mrf.mxu0
        %v570 = vadd.f32 %v517, %v569
        %571 = vmatmul.bf16.gmra.mxu0 %v539
        %v572 = vpop.f32.mrf.mxu0
        %v573 = vadd.f32 %v517, %v572
        %v574 = vpop.f32.mrf.mxu0
        %v575 = vadd.f32 %v517, %v574
        %576 = vmatmul.bf16.gmra.mxu0 %v542
        %v577 = vpop.f32.mrf.mxu0
        %v578 = vadd.f32 %v517, %v577
        %v579 = vpop.f32.mrf.mxu0
        %v580 = vadd.f32 %v517, %v579
        %581 = vmatmul.bf16.gmra.mxu0 %v545
        %v582 = vpop.f32.mrf.mxu0
        %v583 = vadd.f32 %v517, %v582
        %v584 = vpop.f32.mrf.mxu0
        %v585 = vadd.f32 %v517, %v584
        %586 = vmatmul.bf16.gmra.mxu0 %v548
        %v587 = vpop.f32.mrf.mxu0
        %v588 = vadd.f32 %v517, %v587
        %v589 = vpop.f32.mrf.mxu0
        %v590 = vadd.f32 %v517, %v589
        %591 = vmatmul.bf16.gmra.mxu0 %v551
        %v592 = vpop.f32.mrf.mxu0
        %v593 = vadd.f32 %v517, %v592
        %v594 = vpop.f32.mrf.mxu0
        %v595 = vadd.f32 %v517, %v594
        %596 = vdwg.mxu0
        %vm597 = vcmp.gt.f32.partialorder %v563, 0.0
        %vm598 = vcmp.gt.f32.partialorder %v565, 0.0
        %vm599 = vcmp.gt.f32.partialorder %v568, 0.0
        %vm600 = vcmp.gt.f32.partialorder %v570, 0.0
        %vm601 = vcmp.gt.f32.partialorder %v573, 0.0
        %vm602 = vcmp.gt.f32.partialorder %v575, 0.0
        %vm603 = vcmp.gt.f32.partialorder %v578, 0.0
        %vm604 = vcmp.gt.f32.partialorder %v580, 0.0
        %vm605 = vcmp.gt.f32.partialorder %v583, 0.0
        %vm606 = vcmp.gt.f32.partialorder %v585, 0.0
        %vm607 = vcmp.gt.f32.partialorder %v588, 0.0
        %vm608 = vcmp.gt.f32.partialorder %v590, 0.0
        %vm609 = vcmp.gt.f32.partialorder %v593, 0.0
        %vm610 = vcmp.gt.f32.partialorder %v595, 0.0
        %v611 = vmul.f32 %v563, 0.2
        %v612 = vmul.f32 %v565, 0.2
        %v613 = vmul.f32 %v568, 0.2
        %v614 = vmul.f32 %v570, 0.2
        %v615 = vmul.f32 %v573, 0.2
        %v616 = vmul.f32 %v575, 0.2
        %v617 = vmul.f32 %v578, 0.2
        %v618 = vmul.f32 %v580, 0.2
        %v619 = vmul.f32 %v583, 0.2
        %v620 = vmul.f32 %v585, 0.2
        %v621 = vmul.f32 %v588, 0.2
        %v622 = vmul.f32 %v590, 0.2
        %v623 = vmul.f32 %v593, 0.2
        %v624 = vmul.f32 %v595, 0.2
        %v625 = vsel %vm597, %v563, %v611
        %v626 = vsel %vm598, %v565, %v612
        %v627 = vsel %vm599, %v568, %v613
        %v628 = vsel %vm600, %v570, %v614
        %v629 = vsel %vm601, %v573, %v615
        %v630 = vsel %vm602, %v575, %v616
        %v631 = vsel %vm603, %v578, %v617
        %v632 = vsel %vm604, %v580, %v618
        %v633 = vsel %vm605, %v583, %v619
        %v634 = vsel %vm606, %v585, %v620
        %v635 = vsel %vm607, %v588, %v621
        %v636 = vsel %vm608, %v590, %v622
        %v637 = vsel %vm609, %v593, %v623
        %v638 = vsel %vm610, %v595, %v624
        %v639 = vpack.c.bf16 %v626, %v625
        %v640 = vpack.c.bf16 %v628, %v627
        %v641 = vpack.c.bf16 %v630, %v629
        %v642 = vpack.c.bf16 %v632, %v631
        %v643 = vpack.c.bf16 %v634, %v633
        %v644 = vpack.c.bf16 %v636, %v635
        %v645 = vpack.c.bf16 %v638, %v637
        %v646 = vld [vmem:[%s5] sm:$0xf]
        %v647 = vld [vmem:[%s5 + $0x4] sm:$0xf]
        %v648 = vld [vmem:[%s5 + $0x8] sm:$0xf]
        %v649 = vld [vmem:[%s5 + $0xc] sm:$0xf]
        %v650 = vld [vmem:[%s6] sm:$0x1]
        %v652 = vperm.slane %v650, 0
        %v658 = vunpack.c.l.b16 %v646
        %v659 = vunpack.c.l.b16 %v647
        %v660 = vunpack.c.l.b16 %v648
        %v661 = vunpack.c.l.b16 %v649
        %v662 = vpack.c.b16 %v659, %v658
        %v663 = vpack.c.b16 %v661, %v660
        %v667 = vsel %vm531, %v639, 0
        %v670 = vsel %vm531, %v640, 0
        %v673 = vsel %vm531, %v641, 0
        %v676 = vsel %vm531, %v642, 0
        %v679 = vsel %vm531, %v643, 0
        %v682 = vsel %vm531, %v644, 0
        %v685 = vsel %vm531, %v645, 0
        %687 = vmatpush.bf16.msra.mxu0 0
        %688 = vmatpush.bf16.msra.mxu0 0
        %689 = vmatpush.bf16.msra.mxu0 0
        %690 = vmatpush.bf16.msra.mxu0 0
        %691 = vmatpush.bf16.msra.mxu0 0
        %692 = vmatpush.bf16.msra.mxu0 0
        %693 = vmatpush.bf16.msra.mxu0 %v663
        %694 = vmatpush.bf16.msra.mxu0 %v662
        %695 = vmatmul.bf16.gmra.mxu0 %v667
        %v696 = vpop.f32.mrf.mxu0
        %v697 = vadd.f32 %v652, %v696
        %v698 = vpop.f32.mrf.mxu0
        %v699 = vadd.f32 %v652, %v698
        %700 = vmatmul.bf16.gmra.mxu0 %v670
        %v701 = vpop.f32.mrf.mxu0
        %v702 = vadd.f32 %v652, %v701
        %v703 = vpop.f32.mrf.mxu0
        %v704 = vadd.f32 %v652, %v703
        %705 = vmatmul.bf16.gmra.mxu0 %v673
        %v706 = vpop.f32.mrf.mxu0
        %v707 = vadd.f32 %v652, %v706
        %v708 = vpop.f32.mrf.mxu0
        %v709 = vadd.f32 %v652, %v708
        %710 = vmatmul.bf16.gmra.mxu0 %v676
        %v711 = vpop.f32.mrf.mxu0
        %v712 = vadd.f32 %v652, %v711
        %v713 = vpop.f32.mrf.mxu0
        %v714 = vadd.f32 %v652, %v713
        %715 = vmatmul.bf16.gmra.mxu0 %v679
        %v716 = vpop.f32.mrf.mxu0
        %v717 = vadd.f32 %v652, %v716
        %v718 = vpop.f32.mrf.mxu0
        %v719 = vadd.f32 %v652, %v718
        %720 = vmatmul.bf16.gmra.mxu0 %v682
        %v721 = vpop.f32.mrf.mxu0
        %v722 = vadd.f32 %v652, %v721
        %v723 = vpop.f32.mrf.mxu0
        %v724 = vadd.f32 %v652, %v723
        %725 = vmatmul.bf16.gmra.mxu0 %v685
        %v726 = vpop.f32.mrf.mxu0
        %v727 = vadd.f32 %v652, %v726
        %v728 = vpop.f32.mrf.mxu0
        %v729 = vadd.f32 %v652, %v728
        %730 = vdwg.mxu0
        %vm731 = vcmp.gt.f32.partialorder %v697, 0.0
        %vm732 = vcmp.gt.f32.partialorder %v699, 0.0
        %vm733 = vcmp.gt.f32.partialorder %v702, 0.0
        %vm734 = vcmp.gt.f32.partialorder %v704, 0.0
        %vm735 = vcmp.gt.f32.partialorder %v707, 0.0
        %vm736 = vcmp.gt.f32.partialorder %v709, 0.0
        %vm737 = vcmp.gt.f32.partialorder %v712, 0.0
        %vm738 = vcmp.gt.f32.partialorder %v714, 0.0
        %vm739 = vcmp.gt.f32.partialorder %v717, 0.0
        %vm740 = vcmp.gt.f32.partialorder %v719, 0.0
        %vm741 = vcmp.gt.f32.partialorder %v722, 0.0
        %vm742 = vcmp.gt.f32.partialorder %v724, 0.0
        %vm743 = vcmp.gt.f32.partialorder %v727, 0.0
        %vm744 = vcmp.gt.f32.partialorder %v729, 0.0
        %v745 = vmul.f32 %v697, 0.2
        %v746 = vmul.f32 %v699, 0.2
        %v747 = vmul.f32 %v702, 0.2
        %v748 = vmul.f32 %v704, 0.2
        %v749 = vmul.f32 %v707, 0.2
        %v750 = vmul.f32 %v709, 0.2
        %v751 = vmul.f32 %v712, 0.2
        %v752 = vmul.f32 %v714, 0.2
        %v753 = vmul.f32 %v717, 0.2
        %v754 = vmul.f32 %v719, 0.2
        %v755 = vmul.f32 %v722, 0.2
        %v756 = vmul.f32 %v724, 0.2
        %v757 = vmul.f32 %v727, 0.2
        %v758 = vmul.f32 %v729, 0.2
        %v759 = vsel %vm731, %v697, %v745
        %v760 = vsel %vm732, %v699, %v746
        %v761 = vsel %vm733, %v702, %v747
        %v762 = vsel %vm734, %v704, %v748
        %v763 = vsel %vm735, %v707, %v749
        %v764 = vsel %vm736, %v709, %v750
        %v765 = vsel %vm737, %v712, %v751
        %v766 = vsel %vm738, %v714, %v752
        %v767 = vsel %vm739, %v717, %v753
        %v768 = vsel %vm740, %v719, %v754
        %v769 = vsel %vm741, %v722, %v755
        %v770 = vsel %vm742, %v724, %v756
        %v771 = vsel %vm743, %v727, %v757
        %v772 = vsel %vm744, %v729, %v758
        %v773 = vpack.c.bf16 %v760, %v759
        %v774 = vpack.c.bf16 %v762, %v761
        %v775 = vpack.c.bf16 %v764, %v763
        %v776 = vpack.c.bf16 %v766, %v765
        %v777 = vpack.c.bf16 %v768, %v767
        %v778 = vpack.c.bf16 %v770, %v769
        %v779 = vpack.c.bf16 %v772, %v771
        %v780 = vld [vmem:[%s7] sm:$0xf]
        %v781 = vld [vmem:[%s7 + $0x4] sm:$0xf]
        %v782 = vld [vmem:[%s7 + $0x8] sm:$0xf]
        %v783 = vld [vmem:[%s7 + $0xc] sm:$0xf]
        %v784 = vld [vmem:[%s8] sm:$0x1]
        %v786 = vperm.slane %v784, 0
        %v792 = vunpack.c.l.b16 %v780
        %v793 = vunpack.c.l.b16 %v781
        %v794 = vunpack.c.l.b16 %v782
        %v795 = vunpack.c.l.b16 %v783
        %v796 = vpack.c.b16 %v793, %v792
        %v797 = vpack.c.b16 %v795, %v794
        %v801 = vsel %vm531, %v773, 0
        %v804 = vsel %vm531, %v774, 0
        %v807 = vsel %vm531, %v775, 0
        %v810 = vsel %vm531, %v776, 0
        %v813 = vsel %vm531, %v777, 0
        %v816 = vsel %vm531, %v778, 0
        %v819 = vsel %vm531, %v779, 0
        %821 = vmatpush.bf16.msra.mxu0 0
        %822 = vmatpush.bf16.msra.mxu0 0
        %823 = vmatpush.bf16.msra.mxu0 0
        %824 = vmatpush.bf16.msra.mxu0 0
        %825 = vmatpush.bf16.msra.mxu0 0
        %826 = vmatpush.bf16.msra.mxu0 0
        %827 = vmatpush.bf16.msra.mxu0 %v797
        %828 = vmatpush.bf16.msra.mxu0 %v796
        %829 = vmatmul.bf16.gmra.mxu0 %v801
        %v830 = vpop.f32.mrf.mxu0
        %v831 = vadd.f32 %v786, %v830
        %v832 = vpop.f32.mrf.mxu0
        %v833 = vadd.f32 %v786, %v832
        %834 = vmatmul.bf16.gmra.mxu0 %v804
        %v835 = vpop.f32.mrf.mxu0
        %v836 = vadd.f32 %v786, %v835
        %v837 = vpop.f32.mrf.mxu0
        %v838 = vadd.f32 %v786, %v837
        %839 = vmatmul.bf16.gmra.mxu0 %v807
        %v840 = vpop.f32.mrf.mxu0
        %v841 = vadd.f32 %v786, %v840
        %v842 = vpop.f32.mrf.mxu0
        %v843 = vadd.f32 %v786, %v842
        %844 = vmatmul.bf16.gmra.mxu0 %v810
        %v845 = vpop.f32.mrf.mxu0
        %v846 = vadd.f32 %v786, %v845
        %v847 = vpop.f32.mrf.mxu0
        %v848 = vadd.f32 %v786, %v847
        %849 = vmatmul.bf16.gmra.mxu0 %v813
        %v850 = vpop.f32.mrf.mxu0
        %v851 = vadd.f32 %v786, %v850
        %v852 = vpop.f32.mrf.mxu0
        %v853 = vadd.f32 %v786, %v852
        %854 = vmatmul.bf16.gmra.mxu0 %v816
        %v855 = vpop.f32.mrf.mxu0
        %v856 = vadd.f32 %v786, %v855
        %v857 = vpop.f32.mrf.mxu0
        %v858 = vadd.f32 %v786, %v857
        %859 = vmatmul.bf16.gmra.mxu0 %v819
        %v860 = vpop.f32.mrf.mxu0
        %v861 = vadd.f32 %v786, %v860
        %v862 = vpop.f32.mrf.mxu0
        %v863 = vadd.f32 %v786, %v862
        %864 = vdwg.mxu0
        %865 = vst [vmem:[%s326] sm:$0xff] %v831
        %866 = vst [vmem:[%s326 + $0x8] sm:$0xff] %v833
        %867 = vst [vmem:[%s326 + $0x10] sm:$0xff] %v836
        %868 = vst [vmem:[%s326 + $0x18] sm:$0xff] %v838
        %869 = vst [vmem:[%s326 + $0x20] sm:$0xff] %v841
        %870 = vst [vmem:[%s326 + $0x28] sm:$0xff] %v843
        %871 = vst [vmem:[%s326 + $0x30] sm:$0xff] %v846
        %872 = vst [vmem:[%s326 + $0x38] sm:$0xff] %v848
        %873 = vst [vmem:[%s326 + $0x40] sm:$0xff] %v851
        %874 = vst [vmem:[%s326 + $0x48] sm:$0xff] %v853
        %875 = vst [vmem:[%s326 + $0x50] sm:$0xff] %v856
        %876 = vst [vmem:[%s326 + $0x58] sm:$0xff] %v858
        %877 = vst [vmem:[%s326 + $0x60] sm:$0xff] %v861
        %878 = vst [vmem:[%s326 + $0x68] sm:$0xff] %v863
        %s879 = sand.u32 %s225, 1
        %s880 = scalar_lea.sflag [#allocation3], %s879
        %s881 = sand.u32 %s225, 1
        %s882 = smul.addr %s881, 112
        %s883 = scalar_lea.vmem [#allocation2], %s882
        // Predicated region
        $region57: #{tpu_custom_call.1} parent=55 // pred_check
          %p884 = pneg %p235
        $region58: #{tpu_custom_call.1} parent=55 // pred_check_branch
          %886 = sbr.rel (%p884) target = $region60
        $region59: #{tpu_custom_call.1} parent=55 // pred_region
          %s887 = smul.u32 14, %s23
          %889 = vsyncadd %s880, 0
          %s890 = smul.addr %s887, 8
          %s891 = scalar_lea.hbm %s9, %s890
          %s892 = sshll.u32 %s883, 4
          %s893 = int_to_ptr.vmem [resolvable:$true] %s892
          %s894 = sshll.u32 %s891, 4
          %s895 = int_to_ptr.hbm [resolvable:$true] %s894
          %900 = dma.vmem_to_hbm [thread:$0]  %s893, 1792, %s895, %s880, 128, 128, 8
        $region60: #{tpu_custom_call.1} parent=55 // pred_fallthru
          _
      $region56: #{tpu_custom_call.1} parent=5 // pred_fallthru
        _
      %p901 = scmp.le.s32.totalorder 2, %s18
      // Predicated region
      $region61: #{tpu_custom_call.1} parent=5 // pred_check
        %p902 = pneg %p901
      $region62: #{tpu_custom_call.1} parent=5 // pred_check_branch
        %904 = sbr.rel (%p902) target = $region64
      $region63: #{tpu_custom_call.1} parent=5 // pred_region
        %s905 = ssub.s32 %s18, 2
        // Predicated region
        $region65: #{tpu_custom_call.1} parent=63 // pred_check
          %p906 = pneg %p241
        $region66: #{tpu_custom_call.1} parent=63 // pred_check_branch
          %908 = sbr.rel (%p906) target = $region68
        $region67: #{tpu_custom_call.1} parent=63 // pred_region
          %s909 = sand.u32 %s226, 1
          %s910 = scalar_lea.sflag [#allocation3], %s909
          %s911 = sand.u32 %s226, 1
          %s912 = smul.addr %s911, 112
          %s913 = scalar_lea.vmem [#allocation2], %s912
          %915 = dma.done %s910, 1792
        $region68: #{tpu_custom_call.1} parent=63 // pred_fallthru
          _
      $region64: #{tpu_custom_call.1} parent=5 // pred_fallthru
        _
    $region6: #{tpu_custom_call.1} parent=1 // loop_footer
      %s22 = sadd.s32 1, %s18
    $region7: #{tpu_custom_call.1} parent=1 // loop_footer_branch
      %17 = sbr.rel target = $region3
    $region8: #{tpu_custom_call.1} parent=1 // loop_exit
      _
    %916 = vsyncpa [#allocation3], 1
    %s917 = scalar_lea.sflag [#allocation3], 1
    %918 = vsyncpa %s917, 1

</llo_original>
